<compile_context>
chip_gen: v6e
topology: v6e:2x2x1
jax: 0.10.0
libtpu: 0.0.40
codegen_flags: <defaults>
</compile_context>

<pallas_src>
import functools
import math

import numpy as np
import jax
import jax.numpy as jnp
from jax.experimental import pallas as pl
from jax.experimental.pallas import tpu as pltpu


def _as_pair(v, dim=2):
    if isinstance(v, (int, float)):
        return [v] * dim
    return list(v)


def _ceil_to(v, m):
    return ((int(v) + m - 1) // m) * m


def _cdiv(a, b):
    return (a + b - 1) // b


def _gaussian_taps_1d(size, std):
    """Normalized 1D gaussian taps as Python floats (trace-time constants).

    The PyTorch module builds the 2D kernel as the product of per-dim gaussians and
    normalizes the product; that equals the outer product of the per-dim *normalized*
    1D gaussians, so separable passes are exact.
    """
    size = int(size)
    std = float(std)
    coords = np.arange(size, dtype=np.float64)
    mean = (size - 1) / 2.0
    g = np.exp(-(((coords - mean) / std) ** 2) / 2.0)  # 1/(std*sqrt(2pi)) cancels
    g = g / g.sum()
    return tuple(float(v) for v in g)


def _symmetric_tap_sum(taps, slice_fn):
    """sum_k taps[k] * slice_fn(k), folding symmetric pairs (taps[k] == taps[K-1-k])."""
    K = len(taps)
    acc = None
    for k in range(K // 2):
        term = taps[k] * (slice_fn(k) + slice_fn(K - 1 - k))
        acc = term if acc is None else acc + term
    if K % 2 == 1:
        mid = K // 2
        term = taps[mid] * slice_fn(mid)
        acc = term if acc is None else acc + term
    return acc


def _kernel_planes_on_lanes(x_ref, o_ref, *, taps_h, taps_w, h_out, w_out):
    # x_ref: (H, W, PBLK); o_ref: (H_OUT, W_OUT, PBLK).  Lanes = planes (dense, %128).
    f32 = jnp.float32
    # Pass 1 (H): per-tap ref slices along the 3rd-from-last axis -> no cross-lane
    # or cross-sublane movement; the f32 cast fuses into the multiply.
    tmp = _symmetric_tap_sum(
        taps_h, lambda k: x_ref[pl.ds(k, h_out), :, :].astype(f32))
    # Pass 2 (W): sublane-axis shifts of an in-vreg value (cheap, XLU slot).
    acc = _symmetric_tap_sum(
        taps_w, lambda k: tmp[:, k:k + w_out, :])
    o_ref[...] = acc.astype(o_ref.dtype)


def _kernel_w_on_lanes(x_ref, o_ref, *, taps_h, taps_w, h_out, w_out):
    # x_ref: (PBLK, H, W); o_ref: (PBLK, H_OUT, W_OUT).  Lanes = W (large-W path).
    f32 = jnp.float32
    tmp = _symmetric_tap_sum(
        taps_h, lambda k: x_ref[:, pl.ds(k, h_out), :].astype(f32))
    acc = _symmetric_tap_sum(
        taps_w, lambda k: tmp[:, :, k:k + w_out])
    o_ref[...] = acc.astype(o_ref.dtype)


def _chip_config():
    kind = ""
    try:
        kind = jax.devices()[0].device_kind.lower()
    except Exception:
        pass
    if "v7" in kind:
        # 2 TensorCores sharing work, 64 MiB VMEM per TC: stay well under, even grid.
        return dict(vmem_budget=36 << 20, vmem_limit=48 << 20, prefer_even_grid=True)
    if any(t in kind for t in ("v6", "v5e", "v5 lite", "v5litepod")):
        # Single TC, 128 MiB VMEM, bandwidth-bound: favour big blocks / big DMAs.
        return dict(vmem_budget=48 << 20, vmem_limit=96 << 20, prefer_even_grid=False)
    # Unknown chip: conservative defaults that compile everywhere.
    return dict(vmem_budget=24 << 20, vmem_limit=32 << 20, prefer_even_grid=True)


def gaussian_smoothing(x, channels, kernel_size, sigma):
    """Depthwise valid-mode gaussian conv2d (== F.conv2d(groups=C)). NCHW in / NCHW out."""
    B, C, H, W = x.shape
    assert C == channels

    ks = _as_pair(kernel_size)
    sg = _as_pair(sigma)
    taps_h = _gaussian_taps_1d(ks[0], sg[0])
    taps_w = _gaussian_taps_1d(ks[1], sg[1])
    KH, KW = len(taps_h), len(taps_w)
    H_OUT, W_OUT = H - KH + 1, W - KW + 1
    assert H_OUT >= 1 and W_OUT >= 1

    P = B * C
    itemsize = jnp.dtype(x.dtype).itemsize
    sub = max(8, (8 * 4) // itemsize)          # sublane tile multiple for this dtype
    cfg = _chip_config()
    budget, limit = cfg["vmem_budget"], cfg["vmem_limit"]

    # Padding-aware VMEM accounting: (8,128)/dtype tiling, double-buffered in/out,
    # plus f32 intermediates that may spill to VMEM.
    def bytes_planes_on_lanes(p_blk):
        inp = H * _ceil_to(W, sub) * p_blk * itemsize
        out = H_OUT * _ceil_to(W_OUT, sub) * p_blk * itemsize
        mid = (H_OUT * _ceil_to(W, 8) * p_blk * 4
               + H_OUT * _ceil_to(W_OUT, 8) * p_blk * 4)
        return 2 * (inp + out) + mid

    def bytes_w_on_lanes(p_blk):
        inp = p_blk * _ceil_to(H, sub) * _ceil_to(W, 128) * itemsize
        out = p_blk * _ceil_to(H_OUT, sub) * _ceil_to(W_OUT, 128) * itemsize
        mid = (p_blk * _ceil_to(H_OUT, 8) * _ceil_to(W, 128) * 4
               + p_blk * _ceil_to(H_OUT, 8) * _ceil_to(W_OUT, 128) * 4)
        return 2 * (inp + out) + mid

    kern_kwargs = dict(taps_h=taps_h, taps_w=taps_w, h_out=H_OUT, w_out=W_OUT)
    cparams = pltpu.CompilerParams(
        dimension_semantics=("parallel",), vmem_limit_bytes=limit)

    use_planes_on_lanes = (W < 128) and (bytes_planes_on_lanes(128) <= budget)

    if use_planes_on_lanes:
        # Lane-dense path: planes on lanes, block (H, W, p_blk) with p_blk % 128 == 0.
        groups_needed = _cdiv(P, 128)
        groups_fit = max(1, budget // bytes_planes_on_lanes(128))
        p_blk = 128 * min(groups_needed, groups_fit)
        n_blocks = _cdiv(P, p_blk)
        if cfg["prefer_even_grid"] and n_blocks > 1 and n_blocks % 2 == 1:
            n_blocks += 1                      # even split across v7x's two TensorCores
        P_pad = n_blocks * p_blk

        x_t = jnp.transpose(x.reshape(P, H, W), (1, 2, 0))      # (H, W, P)
        if P_pad != P:
            x_t = jnp.pad(x_t, ((0, 0), (0, 0), (0, P_pad - P)))

        out_t = pl.pallas_call(
            functools.partial(_kernel_planes_on_lanes, **kern_kwargs),
            out_shape=jax.ShapeDtypeStruct((H_OUT, W_OUT, P_pad), x.dtype),
            grid=(n_blocks,),
            in_specs=[pl.BlockSpec((H, W, p_blk), lambda g: (0, 0, g))],
            out_specs=pl.BlockSpec((H_OUT, W_OUT, p_blk), lambda g: (0, 0, g)),
            compiler_params=cparams,
        )(x_t)

        out_flat = jnp.transpose(out_t[:, :, :P], (2, 0, 1))    # (P, H_OUT, W_OUT)
        return out_flat.reshape(B, C, H_OUT, W_OUT)

    # Large-W fallback: W already lane-dense; planes stay on the leading block axis.
    per_plane = bytes_w_on_lanes(1)
    p_blk = int(max(1, min(P, budget // max(1, per_plane))))
    n_blocks = _cdiv(P, p_blk)
    if cfg["prefer_even_grid"] and n_blocks > 1 and n_blocks % 2 == 1:
        n_blocks += 1
    P_pad = n_blocks * p_blk

    x_flat = x.reshape(P, H, W)
    if P_pad != P:
        x_flat = jnp.pad(x_flat, ((0, P_pad - P), (0, 0), (0, 0)))

    out_flat = pl.pallas_call(
        functools.partial(_kernel_w_on_lanes, **kern_kwargs),
        out_shape=jax.ShapeDtypeStruct((P_pad, H_OUT, W_OUT), x.dtype),
        grid=(n_blocks,),
        in_specs=[pl.BlockSpec((p_blk, H, W), lambda g: (g, 0, 0))],
        out_specs=pl.BlockSpec((p_blk, H_OUT, W_OUT), lambda g: (g, 0, 0)),
        compiler_params=cparams,
    )(x_flat)

    return out_flat[:P].reshape(B, C, H_OUT, W_OUT)


def _reference(x, channels, kernel_size, sigma):
    """Plain-JAX reference: depthwise valid cross-correlation (== F.conv2d)."""
    ks = _as_pair(kernel_size)
    sg = _as_pair(sigma)
    gh = np.asarray(_gaussian_taps_1d(ks[0], sg[0]), dtype=np.float64)
    gw = np.asarray(_gaussian_taps_1d(ks[1], sg[1]), dtype=np.float64)
    kern2d = np.outer(gh, gw).astype(np.float32)  # (KH, KW)
    KH, KW = kern2d.shape
    B, C, H, W = x.shape
    H_OUT, W_OUT = H - KH + 1, W - KW + 1
    xf = x.astype(jnp.float32)
    acc = jnp.zeros((B, C, H_OUT, W_OUT), jnp.float32)
    for kh in range(KH):
        for kw in range(KW):
            acc = acc + float(kern2d[kh, kw]) * xf[:, :, kh:kh + H_OUT, kw:kw + W_OUT]
    return acc.astype(x.dtype)


if __name__ == "__main__":
    channels = 4
    kernel_size = 5
    sigma = 1.0

    key = jax.random.PRNGKey(0)
    x = jax.random.normal(key, (2, channels, 16, 16), dtype=jnp.float32)

    out = gaussian_smoothing(x, channels, kernel_size, sigma)
    out = jax.block_until_ready(out)

    ref = _reference(x, channels, kernel_size, sigma)
    assert out.shape == (2, channels, 12, 12), out.shape
    assert jnp.allclose(out, ref, atol=1e-5, rtol=1e-5), "mismatch vs reference"

    print("KERNEL_OK")
</pallas_src>

<mosaic_0001>
module attributes {stable_mosaic.version = 11 : i64} {
  func.func @_kernel_planes_on_lanes(%arg0: i32, %arg1: memref<16x16x128xf32, #tpu.memory_space<vmem>>, %arg2: memref<12x12x128xf32, #tpu.memory_space<vmem>>) attributes {dimension_semantics = [#tpu.dimension_semantics<parallel>], iteration_bounds = array<i64: 1>, scalar_prefetch = 0 : i64, scratch_operands = 0 : i64, tpu.core_type = #tpu.core_type<tc>, window_params = [{transform_indices = @transform_0, window_bounds = array<i64: 16, 16, 128>}, {transform_indices = @transform_1, window_bounds = array<i64: 12, 12, 128>}]} {
    %c0 = arith.constant 0 : index
    %c0_0 = arith.constant 0 : index
    %c0_1 = arith.constant 0 : index
    %0 = vector.load %arg1[%c0, %c0_0, %c0_1] : memref<16x16x128xf32, #tpu.memory_space<vmem>>, vector<12x16x128xf32>
    %c4 = arith.constant 4 : index
    %c0_2 = arith.constant 0 : index
    %c0_3 = arith.constant 0 : index
    %1 = vector.load %arg1[%c4, %c0_2, %c0_3] : memref<16x16x128xf32, #tpu.memory_space<vmem>>, vector<12x16x128xf32>
    %2 = arith.addf %0, %1 : vector<12x16x128xf32>
    %cst = arith.constant 0.054488685 : f32
    %3 = vector.broadcast %cst : f32 to vector<12x16x128xf32>
    %4 = arith.mulf %3, %2 : vector<12x16x128xf32>
    %c1 = arith.constant 1 : index
    %c0_4 = arith.constant 0 : index
    %c0_5 = arith.constant 0 : index
    %5 = vector.load %arg1[%c1, %c0_4, %c0_5] : memref<16x16x128xf32, #tpu.memory_space<vmem>>, vector<12x16x128xf32>
    %c3 = arith.constant 3 : index
    %c0_6 = arith.constant 0 : index
    %c0_7 = arith.constant 0 : index
    %6 = vector.load %arg1[%c3, %c0_6, %c0_7] : memref<16x16x128xf32, #tpu.memory_space<vmem>>, vector<12x16x128xf32>
    %7 = arith.addf %5, %6 : vector<12x16x128xf32>
    %cst_8 = arith.constant 0.244201347 : f32
    %8 = vector.broadcast %cst_8 : f32 to vector<12x16x128xf32>
    %9 = arith.mulf %8, %7 : vector<12x16x128xf32>
    %10 = arith.addf %4, %9 : vector<12x16x128xf32>
    %c2 = arith.constant 2 : index
    %c0_9 = arith.constant 0 : index
    %c0_10 = arith.constant 0 : index
    %11 = vector.load %arg1[%c2, %c0_9, %c0_10] : memref<16x16x128xf32, #tpu.memory_space<vmem>>, vector<12x16x128xf32>
    %cst_11 = arith.constant 0.402619958 : f32
    %12 = vector.broadcast %cst_11 : f32 to vector<12x16x128xf32>
    %13 = arith.mulf %12, %11 : vector<12x16x128xf32>
    %14 = arith.addf %10, %13 : vector<12x16x128xf32>
    %15 = vector.extract_strided_slice %14 {offsets = [0, 0, 0], sizes = [12, 12, 128], strides = [1, 1, 1]} : vector<12x16x128xf32> to vector<12x12x128xf32>
    %16 = vector.extract_strided_slice %14 {offsets = [0, 4, 0], sizes = [12, 12, 128], strides = [1, 1, 1]} : vector<12x16x128xf32> to vector<12x12x128xf32>
    %17 = arith.addf %15, %16 : vector<12x12x128xf32>
    %cst_12 = arith.constant 0.054488685 : f32
    %18 = vector.broadcast %cst_12 : f32 to vector<12x12x128xf32>
    %19 = arith.mulf %18, %17 : vector<12x12x128xf32>
    %20 = vector.extract_strided_slice %14 {offsets = [0, 1, 0], sizes = [12, 12, 128], strides = [1, 1, 1]} : vector<12x16x128xf32> to vector<12x12x128xf32>
    %21 = vector.extract_strided_slice %14 {offsets = [0, 3, 0], sizes = [12, 12, 128], strides = [1, 1, 1]} : vector<12x16x128xf32> to vector<12x12x128xf32>
    %22 = arith.addf %20, %21 : vector<12x12x128xf32>
    %cst_13 = arith.constant 0.244201347 : f32
    %23 = vector.broadcast %cst_13 : f32 to vector<12x12x128xf32>
    %24 = arith.mulf %23, %22 : vector<12x12x128xf32>
    %25 = arith.addf %19, %24 : vector<12x12x128xf32>
    %26 = vector.extract_strided_slice %14 {offsets = [0, 2, 0], sizes = [12, 12, 128], strides = [1, 1, 1]} : vector<12x16x128xf32> to vector<12x12x128xf32>
    %cst_14 = arith.constant 0.402619958 : f32
    %27 = vector.broadcast %cst_14 : f32 to vector<12x12x128xf32>
    %28 = arith.mulf %27, %26 : vector<12x12x128xf32>
    %29 = arith.addf %25, %28 : vector<12x12x128xf32>
    %c0_15 = arith.constant 0 : index
    %c0_16 = arith.constant 0 : index
    %c0_17 = arith.constant 0 : index
    %30 = vector.load %arg2[%c0_15, %c0_16, %c0_17] : memref<12x12x128xf32, #tpu.memory_space<vmem>>, vector<12x12x128xf32>
    tpu.vector_store %arg2[%c0_15, %c0_16, %c0_17], %29 {strides = array<i32>} : memref<12x12x128xf32, #tpu.memory_space<vmem>>, vector<12x12x128xf32>,
    return
  }
  func.func @transform_0(%arg0: i32) -> (i32, i32, i32) {
    %c0_i32 = arith.constant 0 : i32
    %c0_i32_0 = arith.constant 0 : i32
    %c0_i32_1 = arith.constant 0 : i32
    return %c0_i32, %c0_i32_0, %arg0 : i32, i32, i32
  }
  func.func @transform_1(%arg0: i32) -> (i32, i32, i32) {
    %c0_i32 = arith.constant 0 : i32
    %c0_i32_0 = arith.constant 0 : i32
    %c0_i32_1 = arith.constant 0 : i32
    return %c0_i32, %c0_i32_0, %arg0 : i32, i32, i32
  }
}

</mosaic_0001>

<llo_original>
// kernel: tpu_custom_call.1
$region0: #{tpu_custom_call.1}
  #allocation0 [shape = 'u32[]', space=smem, size = 0x4, offset = 0x4, fixed_abs, tag = 'smem constant byte address 0x4 - core index']
  #allocation1 [shape = 'u32[144,128]{1,0:T(1,128)}', space=vmem, size = 0x12000, scoped, tag = 'internal scratch']
  %s0 = inlined_call_operand.hbm [shape: f32[16,16,128], index: 0, kind: input, shape index: {}]
  %s1 = inlined_call_operand.hbm [shape: f32[12,12,128], index: 1, kind: output, shape index: {}]
  %s2 = sld [smem:[#allocation0]]
  $region18: #{tpu_custom_call.1} parent=0
    _
  %s4 = ssub.s32 1, %s2
  %s5 = scalar_select 0, %s4, %s2
  $region1: #{tpu_custom_call.1} parent=0
    #allocation2 [shape = 'u8[131072]{0}', space=vmem, size = 0x20000, scoped, tag = 'input window, operand 0, single buffered']
    #allocation3 [shape = 's32[1]{0}', space=sflag, size = 0x4, scoped, tag = 'scoped memory for tpu_custom_call.1']
    #allocation4 [shape = 's32[1]{0}', space=sflag, size = 0x4, scoped, tag = 'scoped memory for tpu_custom_call.1']
    #allocation5 [shape = 'u8[98304]{0}', space=vmem, size = 0x18000, scoped, tag = 'output window, operand 0, single buffered']
    %6 = vsyncpa [#allocation3], 0
    %7 = vsyncpa [#allocation4], 0
    // Predicated region
    $region2: #{tpu_custom_call.1} parent=1 // pred_check
      _
    $region3: #{tpu_custom_call.1} parent=1 // pred_check_branch
      %9 = sbr.rel (0) target = $region5
    $region4: #{tpu_custom_call.1} parent=1 // pred_region
      %s11 = ssub.s32 4096, 4096
      %12 = vsyncadd [#allocation3], %s11
      %s13 = sshll.u32 [#allocation2], 4
      %s14 = int_to_ptr.vmem [resolvable:$true] %s13
      %19 = dma.hbm_to_vmem [thread:$0]  %s0, 4096, %s14, [#allocation3], 128, 128, 8
    $region5: #{tpu_custom_call.1} parent=1 // pred_fallthru
      _
    // Predicated region
    $region6: #{tpu_custom_call.1} parent=1 // pred_check
      _
    $region7: #{tpu_custom_call.1} parent=1 // pred_check_branch
      %21 = sbr.rel (0) target = $region9
    $region8: #{tpu_custom_call.1} parent=1 // pred_region
      %22 = dma.done [#allocation3], 4096
    $region9: #{tpu_custom_call.1} parent=1 // pred_fallthru
      _
    %v23 = vld [vmem:[#allocation2] sm:$0xff]
    %v24 = vld [vmem:[#allocation2 + $0x8] sm:$0xff]
    %v25 = vld [vmem:[#allocation2 + $0x10] sm:$0xff]
    %v26 = vld [vmem:[#allocation2 + $0x18] sm:$0xff]
    %v27 = vld [vmem:[#allocation2 + $0x20] sm:$0xff]
    %v28 = vld [vmem:[#allocation2 + $0x28] sm:$0xff]
    %v29 = vld [vmem:[#allocation2 + $0x30] sm:$0xff]
    %v30 = vld [vmem:[#allocation2 + $0x38] sm:$0xff]
    %v31 = vld [vmem:[#allocation2 + $0x40] sm:$0xff]
    %v32 = vld [vmem:[#allocation2 + $0x48] sm:$0xff]
    %v33 = vld [vmem:[#allocation2 + $0x50] sm:$0xff]
    %v34 = vld [vmem:[#allocation2 + $0x58] sm:$0xff]
    %v35 = vld [vmem:[#allocation2 + $0x60] sm:$0xff]
    %v36 = vld [vmem:[#allocation2 + $0x68] sm:$0xff]
    %v37 = vld [vmem:[#allocation2 + $0x70] sm:$0xff]
    %v38 = vld [vmem:[#allocation2 + $0x78] sm:$0xff]
    %v39 = vld [vmem:[#allocation2 + $0x80] sm:$0xff]
    %v40 = vld [vmem:[#allocation2 + $0x88] sm:$0xff]
    %v41 = vld [vmem:[#allocation2 + $0x90] sm:$0xff]
    %v42 = vld [vmem:[#allocation2 + $0x98] sm:$0xff]
    %v43 = vld [vmem:[#allocation2 + $0xa0] sm:$0xff]
    %v44 = vld [vmem:[#allocation2 + $0xa8] sm:$0xff]
    %v45 = vld [vmem:[#allocation2 + $0xb0] sm:$0xff]
    %v46 = vld [vmem:[#allocation2 + $0xb8] sm:$0xff]
    %s47 = scalar_lea.vmem [#allocation2], 64
    %v48 = vld [vmem:[%s47] sm:$0xff]
    %v49 = vld [vmem:[%s47 + $0x8] sm:$0xff]
    %v50 = vld [vmem:[%s47 + $0x10] sm:$0xff]
    %v51 = vld [vmem:[%s47 + $0x18] sm:$0xff]
    %v52 = vld [vmem:[%s47 + $0x20] sm:$0xff]
    %v53 = vld [vmem:[%s47 + $0x28] sm:$0xff]
    %v54 = vld [vmem:[%s47 + $0x30] sm:$0xff]
    %v55 = vld [vmem:[%s47 + $0x38] sm:$0xff]
    %v56 = vld [vmem:[%s47 + $0x40] sm:$0xff]
    %v57 = vld [vmem:[%s47 + $0x48] sm:$0xff]
    %v58 = vld [vmem:[%s47 + $0x50] sm:$0xff]
    %v59 = vld [vmem:[%s47 + $0x58] sm:$0xff]
    %v60 = vld [vmem:[%s47 + $0x60] sm:$0xff]
    %v61 = vld [vmem:[%s47 + $0x68] sm:$0xff]
    %v62 = vld [vmem:[%s47 + $0x70] sm:$0xff]
    %v63 = vld [vmem:[%s47 + $0x78] sm:$0xff]
    %v64 = vld [vmem:[%s47 + $0x80] sm:$0xff]
    %v65 = vld [vmem:[%s47 + $0x88] sm:$0xff]
    %v66 = vld [vmem:[%s47 + $0x90] sm:$0xff]
    %v67 = vld [vmem:[%s47 + $0x98] sm:$0xff]
    %v68 = vld [vmem:[%s47 + $0xa0] sm:$0xff]
    %v69 = vld [vmem:[%s47 + $0xa8] sm:$0xff]
    %v70 = vld [vmem:[%s47 + $0xb0] sm:$0xff]
    %v71 = vld [vmem:[%s47 + $0xb8] sm:$0xff]
    %v72 = vadd.f32 %v23, %v48
    %v73 = vadd.f32 %v24, %v49
    %v74 = vadd.f32 %v25, %v50
    %v75 = vadd.f32 %v26, %v51
    %v76 = vadd.f32 %v27, %v52
    %v77 = vadd.f32 %v28, %v53
    %v78 = vadd.f32 %v29, %v54
    %v79 = vadd.f32 %v30, %v55
    %v80 = vadd.f32 %v31, %v56
    %v81 = vadd.f32 %v32, %v57
    %v82 = vadd.f32 %v33, %v58
    %v83 = vadd.f32 %v34, %v59
    %v84 = vadd.f32 %v35, %v60
    %v85 = vadd.f32 %v36, %v61
    %v86 = vadd.f32 %v37, %v62
    %v87 = vadd.f32 %v38, %v63
    %v88 = vadd.f32 %v39, %v64
    %v89 = vadd.f32 %v40, %v65
    %v90 = vadd.f32 %v41, %v66
    %v91 = vadd.f32 %v42, %v67
    %v92 = vadd.f32 %v43, %v68
    %v93 = vadd.f32 %v44, %v69
    %v94 = vadd.f32 %v45, %v70
    %v95 = vadd.f32 %v46, %v71
    %v96 = vmul.f32 %v72, 0.054488685
    %v97 = vmul.f32 %v73, 0.054488685
    %v98 = vmul.f32 %v74, 0.054488685
    %v99 = vmul.f32 %v75, 0.054488685
    %v100 = vmul.f32 %v76, 0.054488685
    %v101 = vmul.f32 %v77, 0.054488685
    %v102 = vmul.f32 %v78, 0.054488685
    %v103 = vmul.f32 %v79, 0.054488685
    %v104 = vmul.f32 %v80, 0.054488685
    %v105 = vmul.f32 %v81, 0.054488685
    %v106 = vmul.f32 %v82, 0.054488685
    %v107 = vmul.f32 %v83, 0.054488685
    %v108 = vmul.f32 %v84, 0.054488685
    %v109 = vmul.f32 %v85, 0.054488685
    %v110 = vmul.f32 %v86, 0.054488685
    %v111 = vmul.f32 %v87, 0.054488685
    %v112 = vmul.f32 %v88, 0.054488685
    %v113 = vmul.f32 %v89, 0.054488685
    %v114 = vmul.f32 %v90, 0.054488685
    %v115 = vmul.f32 %v91, 0.054488685
    %v116 = vmul.f32 %v92, 0.054488685
    %v117 = vmul.f32 %v93, 0.054488685
    %v118 = vmul.f32 %v94, 0.054488685
    %v119 = vmul.f32 %v95, 0.054488685
    %s120 = scalar_lea.vmem [#allocation2], 16
    %v121 = vld [vmem:[%s120] sm:$0xff]
    %v122 = vld [vmem:[%s120 + $0x8] sm:$0xff]
    %v123 = vld [vmem:[%s120 + $0x10] sm:$0xff]
    %v124 = vld [vmem:[%s120 + $0x18] sm:$0xff]
    %v125 = vld [vmem:[%s120 + $0x20] sm:$0xff]
    %v126 = vld [vmem:[%s120 + $0x28] sm:$0xff]
    %v127 = vld [vmem:[%s120 + $0x30] sm:$0xff]
    %v128 = vld [vmem:[%s120 + $0x38] sm:$0xff]
    %v129 = vld [vmem:[%s120 + $0x40] sm:$0xff]
    %v130 = vld [vmem:[%s120 + $0x48] sm:$0xff]
    %v131 = vld [vmem:[%s120 + $0x50] sm:$0xff]
    %v132 = vld [vmem:[%s120 + $0x58] sm:$0xff]
    %v133 = vld [vmem:[%s120 + $0x60] sm:$0xff]
    %v134 = vld [vmem:[%s120 + $0x68] sm:$0xff]
    %v135 = vld [vmem:[%s120 + $0x70] sm:$0xff]
    %v136 = vld [vmem:[%s120 + $0x78] sm:$0xff]
    %v137 = vld [vmem:[%s120 + $0x80] sm:$0xff]
    %v138 = vld [vmem:[%s120 + $0x88] sm:$0xff]
    %v139 = vld [vmem:[%s120 + $0x90] sm:$0xff]
    %v140 = vld [vmem:[%s120 + $0x98] sm:$0xff]
    %v141 = vld [vmem:[%s120 + $0xa0] sm:$0xff]
    %v142 = vld [vmem:[%s120 + $0xa8] sm:$0xff]
    %v143 = vld [vmem:[%s120 + $0xb0] sm:$0xff]
    %v144 = vld [vmem:[%s120 + $0xb8] sm:$0xff]
    %s145 = scalar_lea.vmem [#allocation2], 48
    %v146 = vld [vmem:[%s145] sm:$0xff]
    %v147 = vld [vmem:[%s145 + $0x8] sm:$0xff]
    %v148 = vld [vmem:[%s145 + $0x10] sm:$0xff]
    %v149 = vld [vmem:[%s145 + $0x18] sm:$0xff]
    %v150 = vld [vmem:[%s145 + $0x20] sm:$0xff]
    %v151 = vld [vmem:[%s145 + $0x28] sm:$0xff]
    %v152 = vld [vmem:[%s145 + $0x30] sm:$0xff]
    %v153 = vld [vmem:[%s145 + $0x38] sm:$0xff]
    %v154 = vld [vmem:[%s145 + $0x40] sm:$0xff]
    %v155 = vld [vmem:[%s145 + $0x48] sm:$0xff]
    %v156 = vld [vmem:[%s145 + $0x50] sm:$0xff]
    %v157 = vld [vmem:[%s145 + $0x58] sm:$0xff]
    %v158 = vld [vmem:[%s145 + $0x60] sm:$0xff]
    %v159 = vld [vmem:[%s145 + $0x68] sm:$0xff]
    %v160 = vld [vmem:[%s145 + $0x70] sm:$0xff]
    %v161 = vld [vmem:[%s145 + $0x78] sm:$0xff]
    %v162 = vld [vmem:[%s145 + $0x80] sm:$0xff]
    %v163 = vld [vmem:[%s145 + $0x88] sm:$0xff]
    %v164 = vld [vmem:[%s145 + $0x90] sm:$0xff]
    %v165 = vld [vmem:[%s145 + $0x98] sm:$0xff]
    %v166 = vld [vmem:[%s145 + $0xa0] sm:$0xff]
    %v167 = vld [vmem:[%s145 + $0xa8] sm:$0xff]
    %v168 = vld [vmem:[%s145 + $0xb0] sm:$0xff]
    %v169 = vld [vmem:[%s145 + $0xb8] sm:$0xff]
    %v170 = vadd.f32 %v121, %v146
    %v171 = vadd.f32 %v122, %v147
    %v172 = vadd.f32 %v123, %v148
    %v173 = vadd.f32 %v124, %v149
    %v174 = vadd.f32 %v125, %v150
    %v175 = vadd.f32 %v126, %v151
    %v176 = vadd.f32 %v127, %v152
    %v177 = vadd.f32 %v128, %v153
    %v178 = vadd.f32 %v129, %v154
    %v179 = vadd.f32 %v130, %v155
    %v180 = vadd.f32 %v131, %v156
    %v181 = vadd.f32 %v132, %v157
    %v182 = vadd.f32 %v133, %v158
    %v183 = vadd.f32 %v134, %v159
    %v184 = vadd.f32 %v135, %v160
    %v185 = vadd.f32 %v136, %v161
    %v186 = vadd.f32 %v137, %v162
    %v187 = vadd.f32 %v138, %v163
    %v188 = vadd.f32 %v139, %v164
    %v189 = vadd.f32 %v140, %v165
    %v190 = vadd.f32 %v141, %v166
    %v191 = vadd.f32 %v142, %v167
    %v192 = vadd.f32 %v143, %v168
    %v193 = vadd.f32 %v144, %v169
    %v194 = vmul.f32 %v170, 0.24420135
    %v195 = vmul.f32 %v171, 0.24420135
    %v196 = vmul.f32 %v172, 0.24420135
    %v197 = vmul.f32 %v173, 0.24420135
    %v198 = vmul.f32 %v174, 0.24420135
    %v199 = vmul.f32 %v175, 0.24420135
    %v200 = vmul.f32 %v176, 0.24420135
    %v201 = vmul.f32 %v177, 0.24420135
    %v202 = vmul.f32 %v178, 0.24420135
    %v203 = vmul.f32 %v179, 0.24420135
    %v204 = vmul.f32 %v180, 0.24420135
    %v205 = vmul.f32 %v181, 0.24420135
    %v206 = vmul.f32 %v182, 0.24420135
    %v207 = vmul.f32 %v183, 0.24420135
    %v208 = vmul.f32 %v184, 0.24420135
    %v209 = vmul.f32 %v185, 0.24420135
    %v210 = vmul.f32 %v186, 0.24420135
    %v211 = vmul.f32 %v187, 0.24420135
    %v212 = vmul.f32 %v188, 0.24420135
    %v213 = vmul.f32 %v189, 0.24420135
    %v214 = vmul.f32 %v190, 0.24420135
    %v215 = vmul.f32 %v191, 0.24420135
    %v216 = vmul.f32 %v192, 0.24420135
    %v217 = vmul.f32 %v193, 0.24420135
    %v218 = vadd.f32 %v96, %v194
    %v219 = vadd.f32 %v97, %v195
    %v220 = vadd.f32 %v98, %v196
    %v221 = vadd.f32 %v99, %v197
    %v222 = vadd.f32 %v100, %v198
    %v223 = vadd.f32 %v101, %v199
    %v224 = vadd.f32 %v102, %v200
    %v225 = vadd.f32 %v103, %v201
    %v226 = vadd.f32 %v104, %v202
    %v227 = vadd.f32 %v105, %v203
    %v228 = vadd.f32 %v106, %v204
    %v229 = vadd.f32 %v107, %v205
    %v230 = vadd.f32 %v108, %v206
    %v231 = vadd.f32 %v109, %v207
    %v232 = vadd.f32 %v110, %v208
    %v233 = vadd.f32 %v111, %v209
    %v234 = vadd.f32 %v112, %v210
    %v235 = vadd.f32 %v113, %v211
    %v236 = vadd.f32 %v114, %v212
    %v237 = vadd.f32 %v115, %v213
    %v238 = vadd.f32 %v116, %v214
    %v239 = vadd.f32 %v117, %v215
    %v240 = vadd.f32 %v118, %v216
    %v241 = vadd.f32 %v119, %v217
    %s242 = scalar_lea.vmem [#allocation2], 32
    %v243 = vld [vmem:[%s242] sm:$0xff]
    %v244 = vld [vmem:[%s242 + $0x8] sm:$0xff]
    %v245 = vld [vmem:[%s242 + $0x10] sm:$0xff]
    %v246 = vld [vmem:[%s242 + $0x18] sm:$0xff]
    %v247 = vld [vmem:[%s242 + $0x20] sm:$0xff]
    %v248 = vld [vmem:[%s242 + $0x28] sm:$0xff]
    %v249 = vld [vmem:[%s242 + $0x30] sm:$0xff]
    %v250 = vld [vmem:[%s242 + $0x38] sm:$0xff]
    %v251 = vld [vmem:[%s242 + $0x40] sm:$0xff]
    %v252 = vld [vmem:[%s242 + $0x48] sm:$0xff]
    %v253 = vld [vmem:[%s242 + $0x50] sm:$0xff]
    %v254 = vld [vmem:[%s242 + $0x58] sm:$0xff]
    %v255 = vld [vmem:[%s242 + $0x60] sm:$0xff]
    %v256 = vld [vmem:[%s242 + $0x68] sm:$0xff]
    %v257 = vld [vmem:[%s242 + $0x70] sm:$0xff]
    %v258 = vld [vmem:[%s242 + $0x78] sm:$0xff]
    %v259 = vld [vmem:[%s242 + $0x80] sm:$0xff]
    %v260 = vld [vmem:[%s242 + $0x88] sm:$0xff]
    %v261 = vld [vmem:[%s242 + $0x90] sm:$0xff]
    %v262 = vld [vmem:[%s242 + $0x98] sm:$0xff]
    %v263 = vld [vmem:[%s242 + $0xa0] sm:$0xff]
    %v264 = vld [vmem:[%s242 + $0xa8] sm:$0xff]
    %v265 = vld [vmem:[%s242 + $0xb0] sm:$0xff]
    %v266 = vld [vmem:[%s242 + $0xb8] sm:$0xff]
    %v267 = vmul.f32 %v243, 0.40261996
    %v268 = vmul.f32 %v244, 0.40261996
    %v269 = vmul.f32 %v245, 0.40261996
    %v270 = vmul.f32 %v246, 0.40261996
    %v271 = vmul.f32 %v247, 0.40261996
    %v272 = vmul.f32 %v248, 0.40261996
    %v273 = vmul.f32 %v249, 0.40261996
    %v274 = vmul.f32 %v250, 0.40261996
    %v275 = vmul.f32 %v251, 0.40261996
    %v276 = vmul.f32 %v252, 0.40261996
    %v277 = vmul.f32 %v253, 0.40261996
    %v278 = vmul.f32 %v254, 0.40261996
    %v279 = vmul.f32 %v255, 0.40261996
    %v280 = vmul.f32 %v256, 0.40261996
    %v281 = vmul.f32 %v257, 0.40261996
    %v282 = vmul.f32 %v258, 0.40261996
    %v283 = vmul.f32 %v259, 0.40261996
    %v284 = vmul.f32 %v260, 0.40261996
    %v285 = vmul.f32 %v261, 0.40261996
    %v286 = vmul.f32 %v262, 0.40261996
    %v287 = vmul.f32 %v263, 0.40261996
    %v288 = vmul.f32 %v264, 0.40261996
    %v289 = vmul.f32 %v265, 0.40261996
    %v290 = vmul.f32 %v266, 0.40261996
    %v291 = vadd.f32 %v218, %v267
    %v292 = vadd.f32 %v219, %v268
    %v293 = vadd.f32 %v220, %v269
    %v294 = vadd.f32 %v221, %v270
    %v295 = vadd.f32 %v222, %v271
    %v296 = vadd.f32 %v223, %v272
    %v297 = vadd.f32 %v224, %v273
    %v298 = vadd.f32 %v225, %v274
    %v299 = vadd.f32 %v226, %v275
    %v300 = vadd.f32 %v227, %v276
    %v301 = vadd.f32 %v228, %v277
    %v302 = vadd.f32 %v229, %v278
    %v303 = vadd.f32 %v230, %v279
    %v304 = vadd.f32 %v231, %v280
    %v305 = vadd.f32 %v232, %v281
    %v306 = vadd.f32 %v233, %v282
    %v307 = vadd.f32 %v234, %v283
    %v308 = vadd.f32 %v235, %v284
    %v309 = vadd.f32 %v236, %v285
    %v310 = vadd.f32 %v237, %v286
    %v311 = vadd.f32 %v238, %v287
    %v312 = vadd.f32 %v239, %v288
    %v313 = vadd.f32 %v240, %v289
    %v314 = vadd.f32 %v241, %v290
    %vm339 = vcmask 1043456
    %v340 = vrot.slane %v291, 4
    %v341 = vrot.slane %v292, 4
    %v342 = vsel %vm339, %v340, %v341
    %v343 = vrot.slane %v293, 4
    %v344 = vrot.slane %v294, 4
    %v345 = vsel %vm339, %v343, %v344
    %v346 = vrot.slane %v295, 4
    %v347 = vrot.slane %v296, 4
    %v348 = vsel %vm339, %v346, %v347
    %v349 = vrot.slane %v297, 4
    %v350 = vrot.slane %v298, 4
    %v351 = vsel %vm339, %v349, %v350
    %v352 = vrot.slane %v299, 4
    %v353 = vrot.slane %v300, 4
    %v354 = vsel %vm339, %v352, %v353
    %v355 = vrot.slane %v301, 4
    %v356 = vrot.slane %v302, 4
    %v357 = vsel %vm339, %v355, %v356
    %v358 = vrot.slane %v303, 4
    %v359 = vrot.slane %v304, 4
    %v360 = vsel %vm339, %v358, %v359
    %v361 = vrot.slane %v305, 4
    %v362 = vrot.slane %v306, 4
    %v363 = vsel %vm339, %v361, %v362
    %v364 = vrot.slane %v307, 4
    %v365 = vrot.slane %v308, 4
    %v366 = vsel %vm339, %v364, %v365
    %v367 = vrot.slane %v309, 4
    %v368 = vrot.slane %v310, 4
    %v369 = vsel %vm339, %v367, %v368
    %v370 = vrot.slane %v311, 4
    %v371 = vrot.slane %v312, 4
    %v372 = vsel %vm339, %v370, %v371
    %v373 = vrot.slane %v313, 4
    %v374 = vrot.slane %v314, 4
    %v375 = vsel %vm339, %v373, %v374
    %v400 = vadd.f32 %v291, %v342
    %v401 = vadd.f32 %v292, %v341
    %v402 = vadd.f32 %v293, %v345
    %v403 = vadd.f32 %v294, %v344
    %v404 = vadd.f32 %v295, %v348
    %v405 = vadd.f32 %v296, %v347
    %v406 = vadd.f32 %v297, %v351
    %v407 = vadd.f32 %v298, %v350
    %v408 = vadd.f32 %v299, %v354
    %v409 = vadd.f32 %v300, %v353
    %v410 = vadd.f32 %v301, %v357
    %v411 = vadd.f32 %v302, %v356
    %v412 = vadd.f32 %v303, %v360
    %v413 = vadd.f32 %v304, %v359
    %v414 = vadd.f32 %v305, %v363
    %v415 = vadd.f32 %v306, %v362
    %v416 = vadd.f32 %v307, %v366
    %v417 = vadd.f32 %v308, %v365
    %v418 = vadd.f32 %v309, %v369
    %v419 = vadd.f32 %v310, %v368
    %v420 = vadd.f32 %v311, %v372
    %v421 = vadd.f32 %v312, %v371
    %v422 = vadd.f32 %v313, %v375
    %v423 = vadd.f32 %v314, %v374
    %v424 = vmul.f32 %v400, 0.054488685
    %v425 = vmul.f32 %v401, 0.054488685
    %v426 = vmul.f32 %v402, 0.054488685
    %v427 = vmul.f32 %v403, 0.054488685
    %v428 = vmul.f32 %v404, 0.054488685
    %v429 = vmul.f32 %v405, 0.054488685
    %v430 = vmul.f32 %v406, 0.054488685
    %v431 = vmul.f32 %v407, 0.054488685
    %v432 = vmul.f32 %v408, 0.054488685
    %v433 = vmul.f32 %v409, 0.054488685
    %v434 = vmul.f32 %v410, 0.054488685
    %v435 = vmul.f32 %v411, 0.054488685
    %v436 = vmul.f32 %v412, 0.054488685
    %v437 = vmul.f32 %v413, 0.054488685
    %v438 = vmul.f32 %v414, 0.054488685
    %v439 = vmul.f32 %v415, 0.054488685
    %v440 = vmul.f32 %v416, 0.054488685
    %v441 = vmul.f32 %v417, 0.054488685
    %v442 = vmul.f32 %v418, 0.054488685
    %v443 = vmul.f32 %v419, 0.054488685
    %v444 = vmul.f32 %v420, 0.054488685
    %v445 = vmul.f32 %v421, 0.054488685
    %v446 = vmul.f32 %v422, 0.054488685
    %v447 = vmul.f32 %v423, 0.054488685
    %vm448 = vcmask 1045504
    %v449 = vrot.slane %v291, 2
    %v450 = vrot.slane %v292, 2
    %v451 = vsel %vm448, %v449, %v450
    %v452 = vrot.slane %v293, 2
    %v453 = vrot.slane %v294, 2
    %v454 = vsel %vm448, %v452, %v453
    %v455 = vrot.slane %v295, 2
    %v456 = vrot.slane %v296, 2
    %v457 = vsel %vm448, %v455, %v456
    %v458 = vrot.slane %v297, 2
    %v459 = vrot.slane %v298, 2
    %v460 = vsel %vm448, %v458, %v459
    %v461 = vrot.slane %v299, 2
    %v462 = vrot.slane %v300, 2
    %v463 = vsel %vm448, %v461, %v462
    %v464 = vrot.slane %v301, 2
    %v465 = vrot.slane %v302, 2
    %v466 = vsel %vm448, %v464, %v465
    %v467 = vrot.slane %v303, 2
    %v468 = vrot.slane %v304, 2
    %v469 = vsel %vm448, %v467, %v468
    %v470 = vrot.slane %v305, 2
    %v471 = vrot.slane %v306, 2
    %v472 = vsel %vm448, %v470, %v471
    %v473 = vrot.slane %v307, 2
    %v474 = vrot.slane %v308, 2
    %v475 = vsel %vm448, %v473, %v474
    %v476 = vrot.slane %v309, 2
    %v477 = vrot.slane %v310, 2
    %v478 = vsel %vm448, %v476, %v477
    %v479 = vrot.slane %v311, 2
    %v480 = vrot.slane %v312, 2
    %v481 = vsel %vm448, %v479, %v480
    %v482 = vrot.slane %v313, 2
    %v483 = vrot.slane %v314, 2
    %v484 = vsel %vm448, %v482, %v483
    %v509 = vadd.f32 %v291, %v451
    %v510 = vadd.f32 %v292, %v450
    %v511 = vadd.f32 %v293, %v454
    %v512 = vadd.f32 %v294, %v453
    %v513 = vadd.f32 %v295, %v457
    %v514 = vadd.f32 %v296, %v456
    %v515 = vadd.f32 %v297, %v460
    %v516 = vadd.f32 %v298, %v459
    %v517 = vadd.f32 %v299, %v463
    %v518 = vadd.f32 %v300, %v462
    %v519 = vadd.f32 %v301, %v466
    %v520 = vadd.f32 %v302, %v465
    %v521 = vadd.f32 %v303, %v469
    %v522 = vadd.f32 %v304, %v468
    %v523 = vadd.f32 %v305, %v472
    %v524 = vadd.f32 %v306, %v471
    %v525 = vadd.f32 %v307, %v475
    %v526 = vadd.f32 %v308, %v474
    %v527 = vadd.f32 %v309, %v478
    %v528 = vadd.f32 %v310, %v477
    %v529 = vadd.f32 %v311, %v481
    %v530 = vadd.f32 %v312, %v480
    %v531 = vadd.f32 %v313, %v484
    %v532 = vadd.f32 %v314, %v483
    %v533 = vmul.f32 %v509, 0.24420135
    %v534 = vmul.f32 %v510, 0.24420135
    %v535 = vmul.f32 %v511, 0.24420135
    %v536 = vmul.f32 %v512, 0.24420135
    %v537 = vmul.f32 %v513, 0.24420135
    %v538 = vmul.f32 %v514, 0.24420135
    %v539 = vmul.f32 %v515, 0.24420135
    %v540 = vmul.f32 %v516, 0.24420135
    %v541 = vmul.f32 %v517, 0.24420135
    %v542 = vmul.f32 %v518, 0.24420135
    %v543 = vmul.f32 %v519, 0.24420135
    %v544 = vmul.f32 %v520, 0.24420135
    %v545 = vmul.f32 %v521, 0.24420135
    %v546 = vmul.f32 %v522, 0.24420135
    %v547 = vmul.f32 %v523, 0.24420135
    %v548 = vmul.f32 %v524, 0.24420135
    %v549 = vmul.f32 %v525, 0.24420135
    %v550 = vmul.f32 %v526, 0.24420135
    %v551 = vmul.f32 %v527, 0.24420135
    %v552 = vmul.f32 %v528, 0.24420135
    %v553 = vmul.f32 %v529, 0.24420135
    %v554 = vmul.f32 %v530, 0.24420135
    %v555 = vmul.f32 %v531, 0.24420135
    %v556 = vmul.f32 %v532, 0.24420135
    %vm581 = vcmask 1046528
    %v582 = vrot.slane %v533, 1
    %v583 = vrot.slane %v534, 1
    %v584 = vsel %vm581, %v582, %v583
    %v585 = vrot.slane %v535, 1
    %v586 = vrot.slane %v536, 1
    %v587 = vsel %vm581, %v585, %v586
    %v588 = vrot.slane %v537, 1
    %v589 = vrot.slane %v538, 1
    %v590 = vsel %vm581, %v588, %v589
    %v591 = vrot.slane %v539, 1
    %v592 = vrot.slane %v540, 1
    %v593 = vsel %vm581, %v591, %v592
    %v594 = vrot.slane %v541, 1
    %v595 = vrot.slane %v542, 1
    %v596 = vsel %vm581, %v594, %v595
    %v597 = vrot.slane %v543, 1
    %v598 = vrot.slane %v544, 1
    %v599 = vsel %vm581, %v597, %v598
    %v600 = vrot.slane %v545, 1
    %v601 = vrot.slane %v546, 1
    %v602 = vsel %vm581, %v600, %v601
    %v603 = vrot.slane %v547, 1
    %v604 = vrot.slane %v548, 1
    %v605 = vsel %vm581, %v603, %v604
    %v606 = vrot.slane %v549, 1
    %v607 = vrot.slane %v550, 1
    %v608 = vsel %vm581, %v606, %v607
    %v609 = vrot.slane %v551, 1
    %v610 = vrot.slane %v552, 1
    %v611 = vsel %vm581, %v609, %v610
    %v612 = vrot.slane %v553, 1
    %v613 = vrot.slane %v554, 1
    %v614 = vsel %vm581, %v612, %v613
    %v615 = vrot.slane %v555, 1
    %v616 = vrot.slane %v556, 1
    %v617 = vsel %vm581, %v615, %v616
    %v642 = vadd.f32 %v424, %v584
    %v643 = vadd.f32 %v425, %v583
    %v644 = vadd.f32 %v426, %v587
    %v645 = vadd.f32 %v427, %v586
    %v646 = vadd.f32 %v428, %v590
    %v647 = vadd.f32 %v429, %v589
    %v648 = vadd.f32 %v430, %v593
    %v649 = vadd.f32 %v431, %v592
    %v650 = vadd.f32 %v432, %v596
    %v651 = vadd.f32 %v433, %v595
    %v652 = vadd.f32 %v434, %v599
    %v653 = vadd.f32 %v435, %v598
    %v654 = vadd.f32 %v436, %v602
    %v655 = vadd.f32 %v437, %v601
    %v656 = vadd.f32 %v438, %v605
    %v657 = vadd.f32 %v439, %v604
    %v658 = vadd.f32 %v440, %v608
    %v659 = vadd.f32 %v441, %v607
    %v660 = vadd.f32 %v442, %v611
    %v661 = vadd.f32 %v443, %v610
    %v662 = vadd.f32 %v444, %v614
    %v663 = vadd.f32 %v445, %v613
    %v664 = vadd.f32 %v446, %v617
    %v665 = vadd.f32 %v447, %v616
    %v666 = vmul.f32 %v291, 0.40261996
    %v667 = vmul.f32 %v292, 0.40261996
    %v668 = vmul.f32 %v293, 0.40261996
    %v669 = vmul.f32 %v294, 0.40261996
    %v670 = vmul.f32 %v295, 0.40261996
    %v671 = vmul.f32 %v296, 0.40261996
    %v672 = vmul.f32 %v297, 0.40261996
    %v673 = vmul.f32 %v298, 0.40261996
    %v674 = vmul.f32 %v299, 0.40261996
    %v675 = vmul.f32 %v300, 0.40261996
    %v676 = vmul.f32 %v301, 0.40261996
    %v677 = vmul.f32 %v302, 0.40261996
    %v678 = vmul.f32 %v303, 0.40261996
    %v679 = vmul.f32 %v304, 0.40261996
    %v680 = vmul.f32 %v305, 0.40261996
    %v681 = vmul.f32 %v306, 0.40261996
    %v682 = vmul.f32 %v307, 0.40261996
    %v683 = vmul.f32 %v308, 0.40261996
    %v684 = vmul.f32 %v309, 0.40261996
    %v685 = vmul.f32 %v310, 0.40261996
    %v686 = vmul.f32 %v311, 0.40261996
    %v687 = vmul.f32 %v312, 0.40261996
    %v688 = vmul.f32 %v313, 0.40261996
    %v689 = vmul.f32 %v314, 0.40261996
    %v714 = vrot.slane %v666, 2
    %v715 = vrot.slane %v667, 2
    %v716 = vsel %vm448, %v714, %v715
    %v717 = vrot.slane %v668, 2
    %v718 = vrot.slane %v669, 2
    %v719 = vsel %vm448, %v717, %v718
    %v720 = vrot.slane %v670, 2
    %v721 = vrot.slane %v671, 2
    %v722 = vsel %vm448, %v720, %v721
    %v723 = vrot.slane %v672, 2
    %v724 = vrot.slane %v673, 2
    %v725 = vsel %vm448, %v723, %v724
    %v726 = vrot.slane %v674, 2
    %v727 = vrot.slane %v675, 2
    %v728 = vsel %vm448, %v726, %v727
    %v729 = vrot.slane %v676, 2
    %v730 = vrot.slane %v677, 2
    %v731 = vsel %vm448, %v729, %v730
    %v732 = vrot.slane %v678, 2
    %v733 = vrot.slane %v679, 2
    %v734 = vsel %vm448, %v732, %v733
    %v735 = vrot.slane %v680, 2
    %v736 = vrot.slane %v681, 2
    %v737 = vsel %vm448, %v735, %v736
    %v738 = vrot.slane %v682, 2
    %v739 = vrot.slane %v683, 2
    %v740 = vsel %vm448, %v738, %v739
    %v741 = vrot.slane %v684, 2
    %v742 = vrot.slane %v685, 2
    %v743 = vsel %vm448, %v741, %v742
    %v744 = vrot.slane %v686, 2
    %v745 = vrot.slane %v687, 2
    %v746 = vsel %vm448, %v744, %v745
    %v747 = vrot.slane %v688, 2
    %v748 = vrot.slane %v689, 2
    %v749 = vsel %vm448, %v747, %v748
    %v774 = vadd.f32 %v642, %v716
    %v775 = vadd.f32 %v643, %v715
    %v776 = vadd.f32 %v644, %v719
    %v777 = vadd.f32 %v645, %v718
    %v778 = vadd.f32 %v646, %v722
    %v779 = vadd.f32 %v647, %v721
    %v780 = vadd.f32 %v648, %v725
    %v781 = vadd.f32 %v649, %v724
    %v782 = vadd.f32 %v650, %v728
    %v783 = vadd.f32 %v651, %v727
    %v784 = vadd.f32 %v652, %v731
    %v785 = vadd.f32 %v653, %v730
    %v786 = vadd.f32 %v654, %v734
    %v787 = vadd.f32 %v655, %v733
    %v788 = vadd.f32 %v656, %v737
    %v789 = vadd.f32 %v657, %v736
    %v790 = vadd.f32 %v658, %v740
    %v791 = vadd.f32 %v659, %v739
    %v792 = vadd.f32 %v660, %v743
    %v793 = vadd.f32 %v661, %v742
    %v794 = vadd.f32 %v662, %v746
    %v795 = vadd.f32 %v663, %v745
    %v796 = vadd.f32 %v664, %v749
    %v797 = vadd.f32 %v665, %v748
    %798 = vst [vmem:[#allocation5] sm:$0xff] %v774
    %799 = vst [vmem:[#allocation5 + $0x8] sm:$0xf] %v775
    %800 = vst [vmem:[#allocation5 + $0x10] sm:$0xff] %v776
    %801 = vst [vmem:[#allocation5 + $0x18] sm:$0xf] %v777
    %802 = vst [vmem:[#allocation5 + $0x20] sm:$0xff] %v778
    %803 = vst [vmem:[#allocation5 + $0x28] sm:$0xf] %v779
    %804 = vst [vmem:[#allocation5 + $0x30] sm:$0xff] %v780
    %805 = vst [vmem:[#allocation5 + $0x38] sm:$0xf] %v781
    %806 = vst [vmem:[#allocation5 + $0x40] sm:$0xff] %v782
    %807 = vst [vmem:[#allocation5 + $0x48] sm:$0xf] %v783
    %808 = vst [vmem:[#allocation5 + $0x50] sm:$0xff] %v784
    %809 = vst [vmem:[#allocation5 + $0x58] sm:$0xf] %v785
    %810 = vst [vmem:[#allocation5 + $0x60] sm:$0xff] %v786
    %811 = vst [vmem:[#allocation5 + $0x68] sm:$0xf] %v787
    %812 = vst [vmem:[#allocation5 + $0x70] sm:$0xff] %v788
    %813 = vst [vmem:[#allocation5 + $0x78] sm:$0xf] %v789
    %814 = vst [vmem:[#allocation5 + $0x80] sm:$0xff] %v790
    %815 = vst [vmem:[#allocation5 + $0x88] sm:$0xf] %v791
    %816 = vst [vmem:[#allocation5 + $0x90] sm:$0xff] %v792
    %817 = vst [vmem:[#allocation5 + $0x98] sm:$0xf] %v793
    %818 = vst [vmem:[#allocation5 + $0xa0] sm:$0xff] %v794
    %819 = vst [vmem:[#allocation5 + $0xa8] sm:$0xf] %v795
    %820 = vst [vmem:[#allocation5 + $0xb0] sm:$0xff] %v796
    %821 = vst [vmem:[#allocation5 + $0xb8] sm:$0xf] %v797
    // Predicated region
    $region10: #{tpu_custom_call.1} parent=1 // pred_check
      _
    $region11: #{tpu_custom_call.1} parent=1 // pred_check_branch
      %823 = sbr.rel (0) target = $region13
    $region12: #{tpu_custom_call.1} parent=1 // pred_region
      %s825 = ssub.s32 3072, 3072
      %826 = vsyncadd [#allocation4], %s825
      %s827 = sshll.u32 [#allocation5], 4
      %s828 = int_to_ptr.vmem [resolvable:$true] %s827
      %833 = dma.vmem_to_hbm [thread:$0]  %s828, 3072, %s1, [#allocation4], 128, 128, 8
    $region13: #{tpu_custom_call.1} parent=1 // pred_fallthru
      _
    // Predicated region
    $region14: #{tpu_custom_call.1} parent=1 // pred_check
      _
    $region15: #{tpu_custom_call.1} parent=1 // pred_check_branch
      %835 = sbr.rel (0) target = $region17
    $region16: #{tpu_custom_call.1} parent=1 // pred_region
      %836 = dma.done [#allocation4], 3072
    $region17: #{tpu_custom_call.1} parent=1 // pred_fallthru
      _
    %837 = vsyncpa [#allocation3], 1
    %838 = vsyncpa [#allocation4], 1

</llo_original>
